<compile_context>
chip_gen: v6e
topology: v6e:2x2x1
jax: 0.10.0
libtpu: 0.0.40
codegen_flags: <defaults>
</compile_context>

<pallas_src>
import jax
import jax.numpy as jnp
from jax.experimental import pallas as pl
from jax.experimental.pallas import tpu as pltpu


# ---------------------------------------------------------------------------
# Kernel: fused softmax-map + x @ l2_weights^T
# ---------------------------------------------------------------------------
def _map_linear_kernel(map_ref, l1_ref, x_ref, out_ref, l2w_ref):
    # grid = (j: V2 tiles, i: row tiles).  The row axis is the inner
    # ("arbitrary") loop, so the l2-weight tile is computed once per V2 tile
    # and reused from the VMEM scratch for every row tile (the (V2, E)
    # intermediate never touches HBM).
    @pl.when(pl.program_id(1) == 0)
    def _():
        m = map_ref[...].astype(jnp.float32)                 # (tn, V1)
        m = m - jnp.max(m, axis=1, keepdims=True)
        e = jnp.exp(m)
        # divide -> EUP reciprocal; amortized once per V2 tile.
        p = e * pl.reciprocal(jnp.sum(e, axis=1, keepdims=True), approx=True)
        # (E, tn) = l1^T @ p^T, so the main per-row-tile contraction below is
        # the canonical (tm, E) x (E, tn) MXU feed.  Computed in f32, stored
        # in the compute dtype (x.dtype) to halve scratch bytes / enable
        # native-rate bf16 MXU matmuls.
        l2w = jax.lax.dot_general(
            l1_ref[...].astype(jnp.float32), p,
            dimension_numbers=(((0,), (1,)), ((), ())),
            preferred_element_type=jnp.float32,
        )
        l2w_ref[...] = l2w.astype(l2w_ref.dtype)

    # out tile = x_tile @ l2w_tile, f32 accumulation, lane-dense store in the
    # output dtype (x.dtype) -> no separate XLA cast pass afterwards.
    out_ref[...] = jnp.dot(
        x_ref[...], l2w_ref[...], preferred_element_type=jnp.float32
    ).astype(out_ref.dtype)


# ---------------------------------------------------------------------------
# Tiling / VMEM helpers
# ---------------------------------------------------------------------------
def _round_up(x, m):
    return ((x + m - 1) // m) * m


def _block_bytes(rows, cols, dtype):
    """VMEM footprint of a (rows, cols) block after TPU tiling/padding."""
    itemsize = jnp.dtype(dtype).itemsize
    sub = 8 * max(1, 4 // itemsize)          # 8 sublanes (f32), 16 (bf16), ...
    return _round_up(rows, sub) * _round_up(cols, 128) * itemsize


def _vmem_bytes(tm, tn, V1, E, x_dtype, w_dtype):
    """Actual pipeline footprint: double-buffered blocks + resident scratch."""
    return (2 * _block_bytes(tn, V1, w_dtype)      # map tiles
            + 2 * _block_bytes(V1, E, w_dtype)     # l1 (constant index map)
            + 2 * _block_bytes(tm, E, x_dtype)     # x row tiles
            + 2 * _block_bytes(tm, tn, x_dtype)    # out tiles
            + _block_bytes(E, tn, x_dtype))        # resident l2w scratch


# ---------------------------------------------------------------------------
# Wrapper: MapLinear.forward
# ---------------------------------------------------------------------------
def map_linear_forward(x, l1_weights, map_weights, *, row_tile=None, v2_tile=None):
    if x.ndim < 2:
        raise ValueError("x should be at least 2 dimensional")
    V2, V1 = map_weights.shape
    V1_l1, E = l1_weights.shape
    assert V1_l1 == V1, "map_weights and l1_weights disagree on V1"
    assert x.shape[-1] == E, "x last dim must equal embedding dim E"

    lead = x.shape[:-1]
    N = 1
    for d in lead:
        N *= d

    x_dtype = x.dtype                 # compute / output dtype (no f32 upcast)
    w_dtype = map_weights.dtype
    x2 = x.reshape(N, E)

    # ---- generation-aware VMEM budget ------------------------------------
    try:
        vmem_cap = int(pltpu.get_tpu_info().vmem_capacity_bytes)
    except Exception:
        vmem_cap = 64 * 1024 * 1024   # conservative (v7x-sized) fallback
    vmem_budget = int(vmem_cap * 0.8)  # headroom for Mosaic internal scratch

    # ---- MXU-shaped tiles, lane-dense output ------------------------------
    tm = row_tile if row_tile is not None else 256
    tm = max(128, _round_up(min(tm, _round_up(N, 128)), 128))

    if v2_tile is None:
        # larger tn on 128 MiB parts (v5e/v6e); smaller on v7x (64 MiB/TC).
        v2_tile = 2048 if vmem_cap >= 96 * 1024 * 1024 else 1024
    tn = max(128, (min(v2_tile, _round_up(V2, 128)) // 128) * 128)

    # Shrink tn, then tm, until the real footprint fits the budget.
    while tn > 128 and _vmem_bytes(tm, tn, V1, E, x_dtype, w_dtype) > vmem_budget:
        tn -= 128
    while tm > 128 and _vmem_bytes(tm, tn, V1, E, x_dtype, w_dtype) > vmem_budget:
        tm -= 128
    # TODO(synk): if the resident (V1, E) l1 block alone exceeds the budget,
    # tile V1 (accumulate p_chunk @ l1_chunk into the l2w scratch), and
    # consider single-buffering l1 via pipeline_mode=pl.Buffered(1).

    Np = _round_up(N, tm)
    V2p = _round_up(V2, tn)
    if Np != N:
        x2 = jnp.pad(x2, ((0, Np - N), (0, 0)))
    map_w = map_weights
    if V2p != V2:
        map_w = jnp.pad(map_w, ((0, V2p - V2), (0, 0)))

    grid = (V2p // tn, Np // tm)

    est = _vmem_bytes(tm, tn, V1, E, x_dtype, w_dtype)
    vmem_limit = int(min(vmem_budget, max(est + 4 * 1024 * 1024, 16 * 1024 * 1024)))

    out = pl.pallas_call(
        _map_linear_kernel,
        out_shape=jax.ShapeDtypeStruct((Np, V2p), x_dtype),
        grid=grid,
        in_specs=[
            pl.BlockSpec((tn, V1), lambda j, i: (j, 0)),   # map_weights tile (per V2 tile)
            pl.BlockSpec((V1, E), lambda j, i: (0, 0)),    # l1_weights (DMA'd once)
            pl.BlockSpec((tm, E), lambda j, i: (i, 0)),    # x rows
        ],
        out_specs=pl.BlockSpec((tm, tn), lambda j, i: (i, j)),
        scratch_shapes=[pltpu.VMEM((E, tn), x_dtype)],      # resident l2-weight tile
        compiler_params=pltpu.CompilerParams(
            dimension_semantics=("parallel", "arbitrary"),
            vmem_limit_bytes=vmem_limit,
        ),
    )(map_w, l1_weights, x2)

    out = out[:N, :V2]
    return out.reshape(*lead, V2)


# Pure-JAX reference (mirrors the PyTorch module exactly, in f32).
def _reference(x_f32, l1_weights, map_weights):
    l2_w = jax.nn.softmax(map_weights, axis=1) @ l1_weights
    return x_f32 @ l2_w.T


# ---------------------------------------------------------------------------
# main
# ---------------------------------------------------------------------------
if __name__ == "__main__":
    B, T, E = 2, 8, 32        # batch, sequence, embedding dim
    V1, V2 = 16, 256          # L1 vocab (rows of l1_weights), L2 vocab (rows of map_weights)

    k0, k1, k2 = jax.random.split(jax.random.PRNGKey(0), 3)
    l1_weights = 0.1 * jax.random.normal(k0, (V1, E), jnp.float32)   # frozen encoder weight
    map_weights = 0.1 * jax.random.normal(k1, (V2, V1), jnp.float32)
    # bf16 activations exercise the low-HBM-traffic / native-MXU-rate path.
    x = jax.random.normal(k2, (B, T, E), jnp.float32).astype(jnp.bfloat16)

    # v2_tile=128 exercises the tiled V2 path (grid = (2, 1)) at these shapes;
    # N=16 exercises the row-padding path (padded to tm=128).
    out = map_linear_forward(x, l1_weights, map_weights, v2_tile=128)
    out = jax.block_until_ready(out)

    x_f32 = x.astype(jnp.float32).reshape(-1, E)
    ref = _reference(x_f32, l1_weights, map_weights).reshape(B, T, V2)

    assert out.shape == (B, T, V2)
    assert out.dtype == x.dtype
    err = float(jnp.max(jnp.abs(out.astype(jnp.float32) - ref)))
    # bf16 activations / bf16 l2w storage + approx reciprocal => loosened tolerance.
    assert jnp.allclose(out.astype(jnp.float32), ref, rtol=2e-2, atol=2e-2), \
        f"max abs err {err}"

    print("KERNEL_OK")
</pallas_src>

<mosaic_0001>
module attributes {stable_mosaic.version = 11 : i64} {
  func.func @_map_linear_kernel(%arg0: i32, %arg1: i32, %arg2: memref<128x16xf32, #tpu.memory_space<vmem>>, %arg3: memref<16x32xf32, #tpu.memory_space<vmem>>, %arg4: memref<128x32xbf16, #tpu.memory_space<vmem>>, %arg5: memref<128x128xbf16, #tpu.memory_space<vmem>>, %arg6: memref<32x128xbf16, #tpu.memory_space<vmem>>) attributes {dimension_semantics = [#tpu.dimension_semantics<parallel>, #tpu.dimension_semantics<arbitrary>], iteration_bounds = array<i64: 2, 1>, scalar_prefetch = 0 : i64, scratch_operands = 1 : i64, tpu.core_type = #tpu.core_type<tc>, window_params = [{transform_indices = @transform_0, window_bounds = array<i64: 128, 16>}, {pipeline_mode = #tpu.pipeline_mode<synchronous>, transform_indices = @transform_1, window_bounds = array<i64: 16, 32>}, {transform_indices = @transform_2, window_bounds = array<i64: 128, 32>}, {transform_indices = @transform_3, window_bounds = array<i64: 128, 128>}]} {
    %c0_i32 = arith.constant 0 : i32
    %0 = arith.cmpi eq, %arg1, %c0_i32 : i32
    %1 = arith.extui %0 : i1 to i32
    %c0_i32_0 = arith.constant 0 : i32
    %2 = arith.cmpi ne, %1, %c0_i32_0 : i32
    scf.if %2 {
      %c0_6 = arith.constant 0 : index
      %c0_7 = arith.constant 0 : index
      %8 = vector.load %arg2[%c0_6, %c0_7] : memref<128x16xf32, #tpu.memory_space<vmem>>, vector<128x16xf32>
      %cst_8 = arith.constant dense<0xFF800000> : vector<128xf32>
      %9 = vector.multi_reduction <maximumf>, %8, %cst_8 [1] : vector<128x16xf32> to vector<128xf32>
      %10 = vector.shape_cast %9 : vector<128xf32> to vector<128x1xf32>
      %11 = vector.broadcast %10 : vector<128x1xf32> to vector<128x16xf32>
      %12 = arith.subf %8, %11 : vector<128x16xf32>
      %13 = math.exp %12 : vector<128x16xf32>
      %cst_9 = arith.constant dense<0.000000e+00> : vector<128xf32>
      %14 = vector.multi_reduction <add>, %13, %cst_9 [1] : vector<128x16xf32> to vector<128xf32>
      %15 = vector.shape_cast %14 : vector<128xf32> to vector<128x1xf32>
      %16 = tpu.reciprocal %15 {approx = true} : vector<128x1xf32> -> vector<128x1xf32>
      %17 = vector.broadcast %16 : vector<128x1xf32> to vector<128x16xf32>
      %18 = arith.mulf %13, %17 : vector<128x16xf32>
      %c0_10 = arith.constant 0 : index
      %c0_11 = arith.constant 0 : index
      %19 = vector.load %arg3[%c0_10, %c0_11] : memref<16x32xf32, #tpu.memory_space<vmem>>, vector<16x32xf32>
      %cst_12 = arith.constant dense<0.000000e+00> : vector<32x128xf32>
      %20 = tpu.matmul %19, %18, %cst_12 {dimension_numbers = #tpu.dot_dimension_numbers<[0], [1], [1], [0], [0, 1, 1, 0], [], []>} : vector<16x32xf32>, vector<128x16xf32>, vector<32x128xf32> -> vector<32x128xf32>
      %21 = arith.truncf %20 : vector<32x128xf32> to vector<32x128xbf16>
      %c0_13 = arith.constant 0 : index
      %c0_14 = arith.constant 0 : index
      %22 = vector.load %arg6[%c0_13, %c0_14] : memref<32x128xbf16, #tpu.memory_space<vmem>>, vector<32x128xbf16>
      tpu.vector_store %arg6[%c0_13, %c0_14], %21 {strides = array<i32>} : memref<32x128xbf16, #tpu.memory_space<vmem>>, vector<32x128xbf16>,
    } else {
    }
    %c0 = arith.constant 0 : index
    %c0_1 = arith.constant 0 : index
    %3 = vector.load %arg4[%c0, %c0_1] : memref<128x32xbf16, #tpu.memory_space<vmem>>, vector<128x32xbf16>
    %c0_2 = arith.constant 0 : index
    %c0_3 = arith.constant 0 : index
    %4 = vector.load %arg6[%c0_2, %c0_3] : memref<32x128xbf16, #tpu.memory_space<vmem>>, vector<32x128xbf16>
    %cst = arith.constant dense<0.000000e+00> : vector<128x128xf32>
    %5 = tpu.matmul %3, %4, %cst {dimension_numbers = #tpu.dot_dimension_numbers<[1], [0], [0], [1], [0, 0, 1, 1], [], []>} : vector<128x32xbf16>, vector<32x128xbf16>, vector<128x128xf32> -> vector<128x128xf32>
    %6 = arith.truncf %5 : vector<128x128xf32> to vector<128x128xbf16>
    %c0_4 = arith.constant 0 : index
    %c0_5 = arith.constant 0 : index
    %7 = vector.load %arg5[%c0_4, %c0_5] : memref<128x128xbf16, #tpu.memory_space<vmem>>, vector<128x128xbf16>
    tpu.vector_store %arg5[%c0_4, %c0_5], %6 {strides = array<i32>} : memref<128x128xbf16, #tpu.memory_space<vmem>>, vector<128x128xbf16>,
    return
  }
  func.func @transform_0(%arg0: i32, %arg1: i32) -> (i32, i32) {
    %c0_i32 = arith.constant 0 : i32
    %c0_i32_0 = arith.constant 0 : i32
    return %arg0, %c0_i32 : i32, i32
  }
  func.func @transform_1(%arg0: i32, %arg1: i32) -> (i32, i32) {
    %c0_i32 = arith.constant 0 : i32
    %c0_i32_0 = arith.constant 0 : i32
    %c0_i32_1 = arith.constant 0 : i32
    return %c0_i32, %c0_i32_0 : i32, i32
  }
  func.func @transform_2(%arg0: i32, %arg1: i32) -> (i32, i32) {
    %c0_i32 = arith.constant 0 : i32
    %c0_i32_0 = arith.constant 0 : i32
    return %arg1, %c0_i32 : i32, i32
  }
  func.func @transform_3(%arg0: i32, %arg1: i32) -> (i32, i32) {
    %c0_i32 = arith.constant 0 : i32
    return %arg1, %arg0 : i32, i32
  }
}

</mosaic_0001>

<llo_original>
// kernel: tpu_custom_call.1
$region0: #{tpu_custom_call.1}
  #allocation0 [shape = 'u32[]', space=smem, size = 0x4, offset = 0x4, fixed_abs, tag = 'smem constant byte address 0x4 - core index']
  #allocation1 [shape = 'u32[144,128]{1,0:T(1,128)}', space=vmem, size = 0x12000, scoped, tag = 'internal scratch']
  #allocation2 [shape = 'bf16[32,128]{1,0:T(8,128)(2,1)}', space=vmem, size = 0x2000, scoped, tag = 'scratch operand']
  %s0 = inlined_call_operand.vmem [shape: f32[256,16], index: 0, kind: input, shape index: {}]
  %s1 = inlined_call_operand.vmem [shape: f32[16,32], index: 1, kind: input, shape index: {}]
  %s2 = inlined_call_operand.vmem [shape: bf16[128,32], index: 2, kind: input, shape index: {}]
  %s3 = inlined_call_operand.hbm [shape: bf16[128,256], index: 3, kind: output, shape index: {}]
  %s4 = sld [smem:[#allocation0]]
  $region49: #{tpu_custom_call.1} parent=0
    _
  %s6 = ssub.s32 1, %s4
  %s7 = scalar_select 0, %s6, %s4
  $region1: #{tpu_custom_call.1} parent=0
    #allocation3 [shape = 'u8[65536]{0}', space=vmem, size = 0x10000, scoped, tag = 'output window, operand 0']
    #allocation4 [shape = 's32[2]{0}', space=sflag, size = 0x8, scoped, tag = 'scoped memory for tpu_custom_call.1']
    %8 = vsyncpa [#allocation4], 0
    %s9 = scalar_lea.sflag [#allocation4], 1
    %10 = vsyncpa %s9, 0
    loop: start=0, step=1, limit=4
    $region2: #{tpu_custom_call.1} parent=1 // loop_pre_header
      _
    $region3: #{tpu_custom_call.1} parent=1 // loop_header
      %s12 = sphi 0, %s16
      %p13 = scmp.ge.s32.totalorder %s12, 4
      %s19 = sphi 0, %s31
      %s20 = sphi 0, %s27
      %s21 = sphi 0, %s19
      %s22 = sphi 0, %s20
      %s23 = sphi 0, %s21
      %s24 = sphi 0, %s22
      %s34 = sphi 0, %s36
      %s37 = sphi 0, %s34
      %s38 = sphi 0, %s37
      %s54 = sphi 0, %s38
      %s58 = sphi 0, %s58
      %s60 = sphi 0, %s58
      %s61 = sphi 0, %s60
      %s75 = sphi 0, %s61
      %s81 = sphi 0, %s83
      %s84 = sphi 0, %s81
      %s85 = sphi 0, %s84
      %s101 = sphi 0, %s85
      %s109 = sphi 0, %s111
      %s112 = sphi 0, %s109
      %s113 = sphi 0, %s112
      %s129 = sphi 0, %s113
    $region4: #{tpu_custom_call.1} parent=1 // loop_header_branch
      %15 = sbr.rel (%p13) target = $region8
    $region5: #{tpu_custom_call.1} parent=1 // loop_body
      %s17 = ssub.s32 %s12, 1
      %s18 = ssub.s32 %s12, 2
      %s25 = sadd.s32 1, %s20
      %p26 = scmp.ge.s32.totalorder %s25, 1
      %s27 = scalar_select %p26, 0, %s25
      %s28 = sadd.s32 1, %s19
      %s29 = scalar_select %p26, %s28, %s19
      %p30 = scmp.ge.s32.totalorder %s29, 2
      %s31 = scalar_select %p30, 0, %s29
      %s32 = ssub.s32 %s19, %s31
      %p33 = scmp.eq.s32.totalorder %s32, 0
      %s35 = sadd.s32 %s34, 1
      %s36 = scalar_select %p33, %s34, %s35
      %p39 = pneg %p33
      %p40 = scmp.eq.s32.totalorder %s12, 1
      %p41 = por %p39, %p40
      %p42 = scmp.ne.s32.totalorder %s34, %s37
      %p43 = scmp.eq.s32.totalorder %s12, 0
      %p44 = por %p42, %p43
      %p45 = scmp.ne.s32.totalorder %s34, %s37
      %p46 = scmp.eq.s32.totalorder %s17, 1
      %p47 = por %p45, %p46
      %p48 = scmp.ne.s32.totalorder %s37, %s38
      %p49 = scmp.eq.s32.totalorder %s17, 0
      %p50 = por %p48, %p49
      %p51 = scmp.ne.s32.totalorder %s37, %s38
      %p52 = scmp.eq.s32.totalorder %s18, 1
      %p53 = por %p51, %p52
      %p55 = scmp.ne.s32.totalorder %s38, %s54
      %p56 = scmp.eq.s32.totalorder %s18, 0
      %p57 = por %p55, %p56
      %s59 = sadd.s32 %s58, 1
      %p62 = scmp.eq.s32.totalorder %s12, 1
      %p63 = scmp.ne.s32.totalorder %s58, %s60
      %p64 = scmp.eq.s32.totalorder %s12, 0
      %p65 = por %p63, %p64
      %p66 = scmp.ne.s32.totalorder %s58, %s60
      %p67 = scmp.eq.s32.totalorder %s17, 1
      %p68 = por %p66, %p67
      %p69 = scmp.ne.s32.totalorder %s60, %s61
      %p70 = scmp.eq.s32.totalorder %s17, 0
      %p71 = por %p69, %p70
      %p72 = scmp.ne.s32.totalorder %s60, %s61
      %p73 = scmp.eq.s32.totalorder %s18, 1
      %p74 = por %p72, %p73
      %p76 = scmp.ne.s32.totalorder %s61, %s75
      %p77 = scmp.eq.s32.totalorder %s18, 0
      %p78 = por %p76, %p77
      %s79 = ssub.s32 %s20, %s27
      %p80 = scmp.eq.s32.totalorder %s79, 0
      %s82 = sadd.s32 %s81, 1
      %s83 = scalar_select %p80, %s81, %s82
      %p86 = pneg %p80
      %p87 = scmp.eq.s32.totalorder %s12, 1
      %p88 = por %p86, %p87
      %p89 = scmp.ne.s32.totalorder %s81, %s84
      %p90 = scmp.eq.s32.totalorder %s12, 0
      %p91 = por %p89, %p90
      %p92 = scmp.ne.s32.totalorder %s81, %s84
      %p93 = scmp.eq.s32.totalorder %s17, 1
      %p94 = por %p92, %p93
      %p95 = scmp.ne.s32.totalorder %s84, %s85
      %p96 = scmp.eq.s32.totalorder %s17, 0
      %p97 = por %p95, %p96
      %p98 = scmp.ne.s32.totalorder %s84, %s85
      %p99 = scmp.eq.s32.totalorder %s18, 1
      %p100 = por %p98, %p99
      %p102 = scmp.ne.s32.totalorder %s85, %s101
      %p103 = scmp.eq.s32.totalorder %s18, 0
      %p104 = por %p102, %p103
      %s105 = ssub.s32 %s20, %s27
      %s106 = ssub.s32 %s19, %s31
      %s107 = sor.u32 %s105, %s106
      %p108 = scmp.eq.s32.totalorder %s107, 0
      %s110 = sadd.s32 %s109, 1
      %s111 = scalar_select %p108, %s109, %s110
      %p114 = pneg %p108
      %p115 = scmp.eq.s32.totalorder %s12, 1
      %p116 = por %p114, %p115
      %p117 = scmp.ne.s32.totalorder %s109, %s112
      %p118 = scmp.eq.s32.totalorder %s12, 0
      %p119 = por %p117, %p118
      %p120 = scmp.ne.s32.totalorder %s109, %s112
      %p121 = scmp.eq.s32.totalorder %s17, 1
      %p122 = por %p120, %p121
      %p123 = scmp.ne.s32.totalorder %s112, %s113
      %p124 = scmp.eq.s32.totalorder %s17, 0
      %p125 = por %p123, %p124
      %p126 = scmp.ne.s32.totalorder %s112, %s113
      %p127 = scmp.eq.s32.totalorder %s18, 1
      %p128 = por %p126, %p127
      %p130 = scmp.ne.s32.totalorder %s113, %s129
      %p131 = scmp.eq.s32.totalorder %s18, 0
      %p132 = por %p130, %p131
      %p133 = scmp.le.s32.totalorder 1, %s12
      %p134 = scmp.lt.s32.totalorder %s12, 3
      %p135 = pnand %p133, %p134
      %p136 = pneg %p135
      // Predicated region
      $region9: #{tpu_custom_call.1} parent=5 // pred_check
        _
      $region10: #{tpu_custom_call.1} parent=5 // pred_check_branch
        %138 = sbr.rel (%p135) target = $region12
      $region11: #{tpu_custom_call.1} parent=5 // pred_region
        %s139 = ssub.s32 %s12, 1
        // Predicated region
        $region13: #{tpu_custom_call.1} parent=11 // pred_check
          %p140 = pneg %p71
        $region14: #{tpu_custom_call.1} parent=11 // pred_check_branch
          %142 = sbr.rel (%p140) target = $region16
        $region15: #{tpu_custom_call.1} parent=11 // pred_region
          _
        $region16: #{tpu_custom_call.1} parent=11 // pred_fallthru
          _
        // Predicated region
        $region17: #{tpu_custom_call.1} parent=11 // pred_check
          %p143 = pneg %p97
        $region18: #{tpu_custom_call.1} parent=11 // pred_check_branch
          %145 = sbr.rel (%p143) target = $region20
        $region19: #{tpu_custom_call.1} parent=11 // pred_region
          %s146 = smul.u32 16, %s22
          %p147 = scmp.lt.s32.totalorder %s146, 15
          %s148 = scalar_select %p147, %s146, 15
          %s149 = smul.addr %s148, 4
          %s150 = scalar_lea.vmem %s2, %s149
          %s151 = smul.u32 16, %s22
        $region20: #{tpu_custom_call.1} parent=11 // pred_fallthru
          _
      $region12: #{tpu_custom_call.1} parent=5 // pred_fallthru
        _
      %p152 = scmp.lt.s32.totalorder %s12, 2
      // Predicated region
      $region21: #{tpu_custom_call.1} parent=5 // pred_check
        %p153 = pneg %p152
      $region22: #{tpu_custom_call.1} parent=5 // pred_check_branch
        %155 = sbr.rel (%p153) target = $region24
      $region23: #{tpu_custom_call.1} parent=5 // pred_region
        // Predicated region
        $region25: #{tpu_custom_call.1} parent=23 // pred_check
          %p156 = pneg %p44
        $region26: #{tpu_custom_call.1} parent=23 // pred_check_branch
          %158 = sbr.rel (%p156) target = $region28
        $region27: #{tpu_custom_call.1} parent=23 // pred_region
          %s159 = smul.u32 16, %s19
          %p160 = scmp.lt.s32.totalorder %s159, 31
          %s161 = scalar_select %p160, %s159, 31
          %s162 = smul.addr %s161, 8
          %s163 = scalar_lea.vmem %s0, %s162
          %s164 = smul.u32 16, %s19
        $region28: #{tpu_custom_call.1} parent=23 // pred_fallthru
          _
      $region24: #{tpu_custom_call.1} parent=5 // pred_fallthru
        _
      %p165 = scmp.le.s32.totalorder 1, %s12
      %p166 = scmp.lt.s32.totalorder %s12, 3
      %p167 = pnand %p165, %p166
      %p168 = pneg %p167
      // Predicated region
      $region29: #{tpu_custom_call.1} parent=5 // pred_check
        _
      $region30: #{tpu_custom_call.1} parent=5 // pred_check_branch
        %170 = sbr.rel (%p167) target = $region32
      $region31: #{tpu_custom_call.1} parent=5 // pred_region
        %s171 = ssub.s32 %s12, 1
        %s172 = smul.u32 16, %s21
        %p173 = scmp.lt.s32.totalorder %s172, 31
        %s174 = scalar_select %p173, %s172, 31
        %s175 = smul.addr %s174, 8
        %s176 = scalar_lea.vmem %s0, %s175
        %p177 = pneg %p50
        %p178 = pneg %p47
        %p179 = pneg %p71
        %p180 = pneg %p68
        %s181 = smul.u32 16, %s22
        %p182 = scmp.lt.s32.totalorder %s181, 15
        %s183 = scalar_select %p182, %s181, 15
        %s184 = smul.addr %s183, 4
        %s185 = scalar_lea.vmem %s2, %s184
        %p186 = pneg %p97
        %p187 = pneg %p94
        %p188 = pneg %p125
        %p189 = pneg %p122
        %s190 = sand.u32 %s112, 1
        %s191 = scalar_lea.sflag [#allocation4], %s190
        %s192 = sand.u32 %s112, 1
        %s193 = smul.addr %s192, 64
        %s194 = scalar_lea.vmem [#allocation3], %s193
        %s195 = smul.u32 16, %s21
        %p196 = scmp.lt.s32.totalorder %s195, 31
        %s197 = scalar_select %p196, %s195, 31
        %s198 = smul.addr %s197, 8
        %s199 = scalar_lea.vmem %s0, %s198
        %s200 = smul.u32 16, %s21
        %s201 = smul.u32 16, %s22
        %p202 = scmp.lt.s32.totalorder %s201, 15
        %s203 = scalar_select %p202, %s201, 15
        %s204 = smul.addr %s203, 4
        %s205 = scalar_lea.vmem %s2, %s204
        %s206 = smul.u32 16, %s22
        %s207 = smul.u32 16, %s22
        %p209 = scmp.eq.s32.totalorder %s22, 0
        // Predicated region
        $region33: #{tpu_custom_call.1} parent=31 // pred_check
          %p210 = pneg %p209
        $region34: #{tpu_custom_call.1} parent=31 // pred_check_branch
          %212 = sbr.rel (%p210) target = $region36
        $region35: #{tpu_custom_call.1} parent=31 // pred_region
          %v213 = vld [vmem:[%s199] sm:$0xff]
          %v214 = vld [vmem:[%s199 + $0x8] sm:$0xff]
          %v215 = vld [vmem:[%s199 + $0x10] sm:$0xff]
          %v216 = vld [vmem:[%s199 + $0x18] sm:$0xff]
          %v217 = vld [vmem:[%s199 + $0x20] sm:$0xff]
          %v218 = vld [vmem:[%s199 + $0x28] sm:$0xff]
          %v219 = vld [vmem:[%s199 + $0x30] sm:$0xff]
          %v220 = vld [vmem:[%s199 + $0x38] sm:$0xff]
          %v221 = vld [vmem:[%s199 + $0x40] sm:$0xff]
          %v222 = vld [vmem:[%s199 + $0x48] sm:$0xff]
          %v223 = vld [vmem:[%s199 + $0x50] sm:$0xff]
          %v224 = vld [vmem:[%s199 + $0x58] sm:$0xff]
          %v225 = vld [vmem:[%s199 + $0x60] sm:$0xff]
          %v226 = vld [vmem:[%s199 + $0x68] sm:$0xff]
          %v227 = vld [vmem:[%s199 + $0x70] sm:$0xff]
          %v228 = vld [vmem:[%s199 + $0x78] sm:$0xff]
          %vm229 = vcmask 130048
          %v230 = vsel %vm229, %v213, -inf
          %231 = vmax.xlane.f32.xlu0 %v230
          %v232 = vpop.xlane.xlu0 %231
          %v233 = vsel %vm229, %v214, -inf
          %234 = vmax.xlane.f32.xlu0 %v233
          %v235 = vpop.xlane.xlu0 %234
          %v236 = vsel %vm229, %v215, -inf
          %237 = vmax.xlane.f32.xlu0 %v236
          %v238 = vpop.xlane.xlu0 %237
          %v239 = vsel %vm229, %v216, -inf
          %240 = vmax.xlane.f32.xlu0 %v239
          %v241 = vpop.xlane.xlu0 %240
          %v242 = vsel %vm229, %v217, -inf
          %243 = vmax.xlane.f32.xlu0 %v242
          %v244 = vpop.xlane.xlu0 %243
          %v245 = vsel %vm229, %v218, -inf
          %246 = vmax.xlane.f32.xlu0 %v245
          %v247 = vpop.xlane.xlu0 %246
          %v248 = vsel %vm229, %v219, -inf
          %249 = vmax.xlane.f32.xlu0 %v248
          %v250 = vpop.xlane.xlu0 %249
          %v251 = vsel %vm229, %v220, -inf
          %252 = vmax.xlane.f32.xlu0 %v251
          %v253 = vpop.xlane.xlu0 %252
          %v254 = vsel %vm229, %v221, -inf
          %255 = vmax.xlane.f32.xlu0 %v254
          %v256 = vpop.xlane.xlu0 %255
          %v257 = vsel %vm229, %v222, -inf
          %258 = vmax.xlane.f32.xlu0 %v257
          %v259 = vpop.xlane.xlu0 %258
          %v260 = vsel %vm229, %v223, -inf
          %261 = vmax.xlane.f32.xlu0 %v260
          %v262 = vpop.xlane.xlu0 %261
          %v263 = vsel %vm229, %v224, -inf
          %264 = vmax.xlane.f32.xlu0 %v263
          %v265 = vpop.xlane.xlu0 %264
          %v266 = vsel %vm229, %v225, -inf
          %267 = vmax.xlane.f32.xlu0 %v266
          %v268 = vpop.xlane.xlu0 %267
          %v269 = vsel %vm229, %v226, -inf
          %270 = vmax.xlane.f32.xlu0 %v269
          %v271 = vpop.xlane.xlu0 %270
          %v272 = vsel %vm229, %v227, -inf
          %273 = vmax.xlane.f32.xlu0 %v272
          %v274 = vpop.xlane.xlu0 %273
          %v275 = vsel %vm229, %v228, -inf
          %276 = vmax.xlane.f32.xlu0 %v275
          %v277 = vpop.xlane.xlu0 %276
          %v278 = vsub.f32 %v213, %v232
          %v279 = vsub.f32 %v214, %v235
          %v280 = vsub.f32 %v215, %v238
          %v281 = vsub.f32 %v216, %v241
          %v282 = vsub.f32 %v217, %v244
          %v283 = vsub.f32 %v218, %v247
          %v284 = vsub.f32 %v219, %v250
          %v285 = vsub.f32 %v220, %v253
          %v286 = vsub.f32 %v221, %v256
          %v287 = vsub.f32 %v222, %v259
          %v288 = vsub.f32 %v223, %v262
          %v289 = vsub.f32 %v224, %v265
          %v290 = vsub.f32 %v225, %v268
          %v291 = vsub.f32 %v226, %v271
          %v292 = vsub.f32 %v227, %v274
          %v293 = vsub.f32 %v228, %v277
          %v294 = vmul.f32 %v278, 1.442695
          %v295 = vpow.pop %v294
          %v296 = vmul.f32 %v279, 1.442695
          %v297 = vpow.pop %v296
          %v298 = vmul.f32 %v280, 1.442695
          %v299 = vpow.pop %v298
          %v300 = vmul.f32 %v281, 1.442695
          %v301 = vpow.pop %v300
          %v302 = vmul.f32 %v282, 1.442695
          %v303 = vpow.pop %v302
          %v304 = vmul.f32 %v283, 1.442695
          %v305 = vpow.pop %v304
          %v306 = vmul.f32 %v284, 1.442695
          %v307 = vpow.pop %v306
          %v308 = vmul.f32 %v285, 1.442695
          %v309 = vpow.pop %v308
          %v310 = vmul.f32 %v286, 1.442695
          %v311 = vpow.pop %v310
          %v312 = vmul.f32 %v287, 1.442695
          %v313 = vpow.pop %v312
          %v314 = vmul.f32 %v288, 1.442695
          %v315 = vpow.pop %v314
          %v316 = vmul.f32 %v289, 1.442695
          %v317 = vpow.pop %v316
          %v318 = vmul.f32 %v290, 1.442695
          %v319 = vpow.pop %v318
          %v320 = vmul.f32 %v291, 1.442695
          %v321 = vpow.pop %v320
          %v322 = vmul.f32 %v292, 1.442695
          %v323 = vpow.pop %v322
          %v324 = vmul.f32 %v293, 1.442695
          %v325 = vpow.pop %v324
          %v326 = vsel %vm229, %v295, 0.0
          %327 = vadd.xlane.f32.xlu0 %v326
          %v328 = vpop.xlane.xlu0 %327
          %v329 = vsel %vm229, %v297, 0.0
          %330 = vadd.xlane.f32.xlu0 %v329
          %v331 = vpop.xlane.xlu0 %330
          %v332 = vsel %vm229, %v299, 0.0
          %333 = vadd.xlane.f32.xlu0 %v332
          %v334 = vpop.xlane.xlu0 %333
          %v335 = vsel %vm229, %v301, 0.0
          %336 = vadd.xlane.f32.xlu0 %v335
          %v337 = vpop.xlane.xlu0 %336
          %v338 = vsel %vm229, %v303, 0.0
          %339 = vadd.xlane.f32.xlu0 %v338
          %v340 = vpop.xlane.xlu0 %339
          %v341 = vsel %vm229, %v305, 0.0
          %342 = vadd.xlane.f32.xlu0 %v341
          %v343 = vpop.xlane.xlu0 %342
          %v344 = vsel %vm229, %v307, 0.0
          %345 = vadd.xlane.f32.xlu0 %v344
          %v346 = vpop.xlane.xlu0 %345
          %v347 = vsel %vm229, %v309, 0.0
          %348 = vadd.xlane.f32.xlu0 %v347
          %v349 = vpop.xlane.xlu0 %348
          %v350 = vsel %vm229, %v311, 0.0
          %351 = vadd.xlane.f32.xlu0 %v350
          %v352 = vpop.xlane.xlu0 %351
          %v353 = vsel %vm229, %v313, 0.0
          %354 = vadd.xlane.f32.xlu0 %v353
          %v355 = vpop.xlane.xlu0 %354
          %v356 = vsel %vm229, %v315, 0.0
          %357 = vadd.xlane.f32.xlu0 %v356
          %v358 = vpop.xlane.xlu0 %357
          %v359 = vsel %vm229, %v317, 0.0
          %360 = vadd.xlane.f32.xlu0 %v359
          %v361 = vpop.xlane.xlu0 %360
          %v362 = vsel %vm229, %v319, 0.0
          %363 = vadd.xlane.f32.xlu0 %v362
          %v364 = vpop.xlane.xlu0 %363
          %v365 = vsel %vm229, %v321, 0.0
          %366 = vadd.xlane.f32.xlu0 %v365
          %v367 = vpop.xlane.xlu0 %366
          %v368 = vsel %vm229, %v323, 0.0
          %369 = vadd.xlane.f32.xlu0 %v368
          %v370 = vpop.xlane.xlu0 %369
          %v371 = vsel %vm229, %v325, 0.0
          %372 = vadd.xlane.f32.xlu0 %v371
          %v373 = vpop.xlane.xlu0 %372
          %v374 = vrcp.pop %v328
          %v375 = vrcp.pop %v331
          %v376 = vrcp.pop %v334
          %v377 = vrcp.pop %v337
          %v378 = vrcp.pop %v340
          %v379 = vrcp.pop %v343
          %v380 = vrcp.pop %v346
          %v381 = vrcp.pop %v349
          %v382 = vrcp.pop %v352
          %v383 = vrcp.pop %v355
          %v384 = vrcp.pop %v358
          %v385 = vrcp.pop %v361
          %v386 = vrcp.pop %v364
          %v387 = vrcp.pop %v367
          %v388 = vrcp.pop %v370
          %v389 = vrcp.pop %v373
          %v390 = vmul.f32 %v295, %v374
          %v391 = vmul.f32 %v297, %v375
          %v392 = vmul.f32 %v299, %v376
          %v393 = vmul.f32 %v301, %v377
          %v394 = vmul.f32 %v303, %v378
          %v395 = vmul.f32 %v305, %v379
          %v396 = vmul.f32 %v307, %v380
          %v397 = vmul.f32 %v309, %v381
          %v398 = vmul.f32 %v311, %v382
          %v399 = vmul.f32 %v313, %v383
          %v400 = vmul.f32 %v315, %v384
          %v401 = vmul.f32 %v317, %v385
          %v402 = vmul.f32 %v319, %v386
          %v403 = vmul.f32 %v321, %v387
          %v404 = vmul.f32 %v323, %v388
          %v405 = vmul.f32 %v325, %v389
          %v406 = vld [vmem:[%s1] sm:$0xff]
          %v407 = vld [vmem:[%s1 + $0x8] sm:$0xff]
          %408 = vxpose.xlu0.b32.start [1/16] %v406, 128
          %409 = vxpose.xlu0.b32.cont [2/16] %v407, 128
          %410 = vxpose.xlu0.b32.cont [3/16] 0.0, 128
          %411 = vxpose.xlu0.b32.cont [4/16] 0.0, 128
          %412 = vxpose.xlu0.b32.cont [5/16] 0.0, 128
          %413 = vxpose.xlu0.b32.cont [6/16] 0.0, 128
          %414 = vxpose.xlu0.b32.cont [7/16] 0.0, 128
          %415 = vxpose.xlu0.b32.cont [8/16] 0.0, 128
          %416 = vxpose.xlu0.b32.cont [9/16] 0.0, 128
          %417 = vxpose.xlu0.b32.cont [10/16] 0.0, 128
          %418 = vxpose.xlu0.b32.cont [11/16] 0.0, 128
          %419 = vxpose.xlu0.b32.cont [12/16] 0.0, 128
          %420 = vxpose.xlu0.b32.cont [13/16] 0.0, 128
          %421 = vxpose.xlu0.b32.cont [14/16] 0.0, 128
          %422 = vxpose.xlu0.b32.cont [15/16] 0.0, 128
          %423 = vxpose.xlu0.b32.end [16/16] 0.0, 128
          %v424 = vpop.trf.xlu0
          %v425 = vpop.trf.xlu0
          %v426 = vpop.trf.xlu0
          %v427 = vpop.trf.xlu0
          %v428 = vpop.trf.xlu0
          %v429 = vpop.trf.xlu0
          %v430 = vpop.trf.xlu0
          %v431 = vpop.trf.xlu0
          %v432 = vpop.trf.xlu0
          %v433 = vpop.trf.xlu0
          %v434 = vpop.trf.xlu0
          %v435 = vpop.trf.xlu0
          %v436 = vpop.trf.xlu0
          %v437 = vpop.trf.xlu0
          %v438 = vpop.trf.xlu0
          %v439 = vpop.trf.xlu0
          %v441 = vsel %vm229, %v424, 0
          %v444 = vsel %vm229, %v425, 0
          %v447 = vsel %vm229, %v426, 0
          %v450 = vsel %vm229, %v427, 0
          %v453 = vsel %vm229, %v390, 0
          %v456 = vsel %vm229, %v391, 0
          %v459 = vsel %vm229, %v392, 0
          %v462 = vsel %vm229, %v393, 0
          %v465 = vsel %vm229, %v394, 0
          %v468 = vsel %vm229, %v395, 0
          %v471 = vsel %vm229, %v396, 0
          %v474 = vsel %vm229, %v397, 0
          %v477 = vsel %vm229, %v398, 0
          %v480 = vsel %vm229, %v399, 0
          %v483 = vsel %vm229, %v400, 0
          %v486 = vsel %vm229, %v401, 0
          %v489 = vsel %vm229, %v402, 0
          %v492 = vsel %vm229, %v403, 0
          %v495 = vsel %vm229, %v404, 0
          %v498 = vsel %vm229, %v405, 0
          %500 = vmatprep.subr.mxu0 0.0
          %501 = vmatpush1.xpose.msra.mxu0 %v498
          %502 = vmatprep.subr.mxu0 0.0
          %503 = vmatpush1.xpose.msra.mxu0 %v495
          %504 = vmatprep.subr.mxu0 0.0
          %505 = vmatpush1.xpose.msra.mxu0 %v492
          %506 = vmatprep.subr.mxu0 0.0
          %507 = vmatpush1.xpose.msra.mxu0 %v489
          %508 = vmatprep.subr.mxu0 0.0
          %509 = vmatpush1.xpose.msra.mxu0 %v486
          %510 = vmatprep.subr.mxu0 0.0
          %511 = vmatpush1.xpose.msra.mxu0 %v483
          %512 = vmatprep.subr.mxu0 0.0
          %513 = vmatpush1.xpose.msra.mxu0 %v480
          %514 = vmatprep.subr.mxu0 0.0
          %515 = vmatpush1.xpose.msra.mxu0 %v477
          %516 = vmatprep.subr.mxu0 0.0
          %517 = vmatpush1.xpose.msra.mxu0 %v474
          %518 = vmatprep.subr.mxu0 0.0
          %519 = vmatpush1.xpose.msra.mxu0 %v471
          %520 = vmatprep.subr.mxu0 0.0
          %521 = vmatpush1.xpose.msra.mxu0 %v468
          %522 = vmatprep.subr.mxu0 0.0
          %523 = vmatpush1.xpose.msra.mxu0 %v465
          %524 = vmatprep.subr.mxu0 0.0
          %525 = vmatpush1.xpose.msra.mxu0 %v462
          %526 = vmatprep.subr.mxu0 0.0
          %527 = vmatpush1.xpose.msra.mxu0 %v459
          %528 = vmatprep.subr.mxu0 0.0
          %529 = vmatpush1.xpose.msra.mxu0 %v456
          %530 = vmatprep.subr.mxu0 0.0
          %531 = vmatpush1.xpose.msra.mxu0 %v453
          %532 = vmatprep.subr.mxu0 0.0
          %533 = vmatpush2.xpose.msra.mxu0 0.0
          %534 = vmatprep.subr.mxu0 0.0
          %535 = vmatpush2.xpose.msra.mxu0 0.0
          %536 = vmatprep.subr.mxu0 0.0
          %537 = vmatpush2.xpose.msra.mxu0 0.0
          %538 = vmatprep.subr.mxu0 0.0
          %539 = vmatpush2.xpose.msra.mxu0 0.0
          %540 = vmatprep.subr.mxu0 0.0
          %541 = vmatpush2.xpose.msra.mxu0 0.0
          %542 = vmatprep.subr.mxu0 0.0
          %543 = vmatpush2.xpose.msra.mxu0 0.0
          %544 = vmatprep.subr.mxu0 0.0
          %545 = vmatpush2.xpose.msra.mxu0 0.0
          %546 = vmatprep.subr.mxu0 0.0
          %547 = vmatpush2.xpose.msra.mxu0 0.0
          %548 = vmatprep.subr.mxu0 0.0
          %549 = vmatpush2.xpose.msra.mxu0 0.0
          %550 = vmatprep.subr.mxu0 0.0
          %551 = vmatpush2.xpose.msra.mxu0 0.0
          %552 = vmatprep.subr.mxu0 0.0
          %553 = vmatpush2.xpose.msra.mxu0 0.0
          %554 = vmatprep.subr.mxu0 0.0
          %555 = vmatpush2.xpose.msra.mxu0 0.0
          %556 = vmatprep.subr.mxu0 0.0
          %557 = vmatpush2.xpose.msra.mxu0 0.0
          %558 = vmatprep.subr.mxu0 0.0
          %559 = vmatpush2.xpose.msra.mxu0 0.0
          %560 = vmatprep.subr.mxu0 0.0
          %561 = vmatpush2.xpose.msra.mxu0 0.0
          %562 = vmatprep.subr.mxu0 0.0
          %563 = vmatpush2.xpose.msra.mxu0 0.0
          %564 = vmatprep.mubr.f32.mxu0 0.0
          %565 = vmatmul.mubr.f32.gmra.mxu0 %v441
          %v566 = vpop.f32.mrf.mxu0
          %v567 = vadd.f32 0.0, %v566
          %v568 = vpop.f32.mrf.mxu0
          %569 = vmatprep.mubr.f32.mxu0 0.0
          %570 = vmatmul.mubr.f32.gmra.mxu0 %v444
          %v571 = vpop.f32.mrf.mxu0
          %v572 = vadd.f32 0.0, %v571
          %v573 = vpop.f32.mrf.mxu0
          %574 = vmatprep.mubr.f32.mxu0 0.0
          %575 = vmatmul.mubr.f32.gmra.mxu0 %v447
          %v576 = vpop.f32.mrf.mxu0
          %v577 = vadd.f32 0.0, %v576
          %v578 = vpop.f32.mrf.mxu0
          %579 = vmatprep.mubr.f32.mxu0 0.0
          %580 = vmatmul.mubr.f32.gmra.mxu0 %v450
          %v581 = vpop.f32.mrf.mxu0
          %v582 = vadd.f32 0.0, %v581
          %v583 = vpop.f32.mrf.mxu0
          %584 = vdwg.mxu0
          %v585 = vpack.c.bf16 %v572, %v567
          %v586 = vpack.c.bf16 %v582, %v577
          %v589 = vunpack.c.l.b16 %v585
          %v590 = vunpack.c.h.b16 %v585
          %v591 = vunpack.c.l.b16 %v586
          %v592 = vunpack.c.h.b16 %v586
          %v593 = vpack.c.b16 %v589, %v589
          %v594 = vpack.c.b16 %v590, %v590
          %v595 = vpack.c.b16 %v591, %v591
          %v596 = vpack.c.b16 %v592, %v592
          %601 = vst [vmem:[#allocation2] sm:$0xf] %v593
          %602 = vst [vmem:[#allocation2 + $0x4] sm:$0xf] %v594
          %603 = vst [vmem:[#allocation2 + $0x8] sm:$0xf] %v595
          %604 = vst [vmem:[#allocation2 + $0xc] sm:$0xf] %v596
        $region36: #{tpu_custom_call.1} parent=31 // pred_fallthru
          _
        %v605 = vld [vmem:[%s205] sm:$0xf]
        %v606 = vld [vmem:[%s205 + $0x4] sm:$0xf]
        %v607 = vld [vmem:[%s205 + $0x8] sm:$0xf]
        %v608 = vld [vmem:[%s205 + $0xc] sm:$0xf]
        %v609 = vld [vmem:[%s205 + $0x10] sm:$0xf]
        %v610 = vld [vmem:[%s205 + $0x14] sm:$0xf]
        %v611 = vld [vmem:[%s205 + $0x18] sm:$0xf]
        %v612 = vld [vmem:[%s205 + $0x1c] sm:$0xf]
        %v613 = vld [vmem:[%s205 + $0x20] sm:$0xf]
        %v614 = vld [vmem:[%s205 + $0x24] sm:$0xf]
        %v615 = vld [vmem:[%s205 + $0x28] sm:$0xf]
        %v616 = vld [vmem:[%s205 + $0x2c] sm:$0xf]
        %v617 = vld [vmem:[%s205 + $0x30] sm:$0xf]
        %v618 = vld [vmem:[%s205 + $0x34] sm:$0xf]
        %v619 = vld [vmem:[%s205 + $0x38] sm:$0xf]
        %v620 = vld [vmem:[%s205 + $0x3c] sm:$0xf]
        %v621 = vld [vmem:[#allocation2] sm:$0xf]
        %v622 = vld [vmem:[#allocation2 + $0x4] sm:$0xf]
        %v623 = vld [vmem:[#allocation2 + $0x8] sm:$0xf]
        %v624 = vld [vmem:[#allocation2 + $0xc] sm:$0xf]
        %v641 = vunpack.c.l.b16 %v605
        %v642 = vunpack.c.l.b16 %v606
        %v643 = vunpack.c.l.b16 %v607
        %v644 = vunpack.c.l.b16 %v608
        %v645 = vunpack.c.l.b16 %v609
        %v646 = vunpack.c.l.b16 %v610
        %v647 = vunpack.c.l.b16 %v611
        %v648 = vunpack.c.l.b16 %v612
        %v649 = vunpack.c.l.b16 %v613
        %v650 = vunpack.c.l.b16 %v614
        %v651 = vunpack.c.l.b16 %v615
        %v652 = vunpack.c.l.b16 %v616
        %v653 = vunpack.c.l.b16 %v617
        %v654 = vunpack.c.l.b16 %v618
        %v655 = vunpack.c.l.b16 %v619
        %v656 = vunpack.c.l.b16 %v620
        %v657 = vpack.c.b16 %v642, %v641
        %v658 = vpack.c.b16 %v644, %v643
        %v659 = vpack.c.b16 %v646, %v645
        %v660 = vpack.c.b16 %v648, %v647
        %v661 = vpack.c.b16 %v650, %v649
        %v662 = vpack.c.b16 %v652, %v651
        %v663 = vpack.c.b16 %v654, %v653
        %v664 = vpack.c.b16 %v656, %v655
        %v669 = vunpack.c.l.b16 %v621
        %v670 = vunpack.c.l.b16 %v622
        %v671 = vunpack.c.l.b16 %v623
        %v672 = vunpack.c.l.b16 %v624
        %v673 = vpack.c.b16 %v670, %v669
        %v674 = vpack.c.b16 %v672, %v671
        %vm677 = vcmask 261120
        %v679 = vsel %vm677, %v657, 0
        %v682 = vsel %vm677, %v658, 0
        %v685 = vsel %vm677, %v659, 0
        %v688 = vsel %vm677, %v660, 0
        %v691 = vsel %vm677, %v661, 0
        %v694 = vsel %vm677, %v662, 0
        %v697 = vsel %vm677, %v663, 0
        %v700 = vsel %vm677, %v664, 0
        %702 = vmatprep.subr.bf16.mxu0 0
        %703 = vmatpush1.bf16.msra.mxu0 0
        %704 = vmatprep.subr.bf16.mxu0 0
        %705 = vmatpush1.bf16.msra.mxu0 0
        %706 = vmatprep.subr.bf16.mxu0 0
        %707 = vmatpush1.bf16.msra.mxu0 0
        %708 = vmatprep.subr.bf16.mxu0 0
        %709 = vmatpush1.bf16.msra.mxu0 0
        %710 = vmatprep.subr.bf16.mxu0 0
        %711 = vmatpush1.bf16.msra.mxu0 0
        %712 = vmatprep.subr.bf16.mxu0 0
        %713 = vmatpush1.bf16.msra.mxu0 0
        %714 = vmatprep.subr.bf16.mxu0 0
        %715 = vmatpush1.bf16.msra.mxu0 %v674
        %716 = vmatprep.subr.bf16.mxu0 0
        %717 = vmatpush1.bf16.msra.mxu0 %v673
        %718 = vmatprep.subr.bf16.mxu0 0
        %719 = vmatpush2.bf16.msra.mxu0 0
        %720 = vmatprep.subr.bf16.mxu0 0
        %721 = vmatpush2.bf16.msra.mxu0 0
        %722 = vmatprep.subr.bf16.mxu0 0
        %723 = vmatpush2.bf16.msra.mxu0 0
        %724 = vmatprep.subr.bf16.mxu0 0
        %725 = vmatpush2.bf16.msra.mxu0 0
        %726 = vmatprep.subr.bf16.mxu0 0
        %727 = vmatpush2.bf16.msra.mxu0 0
        %728 = vmatprep.subr.bf16.mxu0 0
        %729 = vmatpush2.bf16.msra.mxu0 0
        %730 = vmatprep.subr.bf16.mxu0 0
        %731 = vmatpush2.bf16.msra.mxu0 0
        %732 = vmatprep.subr.bf16.mxu0 0
        %733 = vmatpush2.bf16.msra.mxu0 0
        %734 = vmatprep.mubr.bf16.mxu0 0
        %735 = vmatmul.mubr.bf16.gmra.mxu0 %v679
        %v736 = vpop.f32.mrf.mxu0
        %v737 = vadd.f32 0.0, %v736
        %v738 = vpop.f32.mrf.mxu0
        %v739 = vpop.f32.mrf.mxu0
        %v740 = vadd.f32 0.0, %v739
        %v741 = vpop.f32.mrf.mxu0
        %742 = vmatprep.mubr.bf16.mxu0 0
        %743 = vmatmul.mubr.bf16.gmra.mxu0 %v682
        %v744 = vpop.f32.mrf.mxu0
        %v745 = vadd.f32 0.0, %v744
        %v746 = vpop.f32.mrf.mxu0
        %v747 = vpop.f32.mrf.mxu0
        %v748 = vadd.f32 0.0, %v747
        %v749 = vpop.f32.mrf.mxu0
        %750 = vmatprep.mubr.bf16.mxu0 0
        %751 = vmatmul.mubr.bf16.gmra.mxu0 %v685
        %v752 = vpop.f32.mrf.mxu0
        %v753 = vadd.f32 0.0, %v752
        %v754 = vpop.f32.mrf.mxu0
        %v755 = vpop.f32.mrf.mxu0
        %v756 = vadd.f32 0.0, %v755
        %v757 = vpop.f32.mrf.mxu0
        %758 = vmatprep.mubr.bf16.mxu0 0
        %759 = vmatmul.mubr.bf16.gmra.mxu0 %v688
        %v760 = vpop.f32.mrf.mxu0
        %v761 = vadd.f32 0.0, %v760
        %v762 = vpop.f32.mrf.mxu0
        %v763 = vpop.f32.mrf.mxu0
        %v764 = vadd.f32 0.0, %v763
        %v765 = vpop.f32.mrf.mxu0
        %766 = vmatprep.mubr.bf16.mxu0 0
        %767 = vmatmul.mubr.bf16.gmra.mxu0 %v691
        %v768 = vpop.f32.mrf.mxu0
        %v769 = vadd.f32 0.0, %v768
        %v770 = vpop.f32.mrf.mxu0
        %v771 = vpop.f32.mrf.mxu0
        %v772 = vadd.f32 0.0, %v771
        %v773 = vpop.f32.mrf.mxu0
        %774 = vmatprep.mubr.bf16.mxu0 0
        %775 = vmatmul.mubr.bf16.gmra.mxu0 %v694
        %v776 = vpop.f32.mrf.mxu0
        %v777 = vadd.f32 0.0, %v776
        %v778 = vpop.f32.mrf.mxu0
        %v779 = vpop.f32.mrf.mxu0
        %v780 = vadd.f32 0.0, %v779
        %v781 = vpop.f32.mrf.mxu0
        %782 = vmatprep.mubr.bf16.mxu0 0
        %783 = vmatmul.mubr.bf16.gmra.mxu0 %v697
        %v784 = vpop.f32.mrf.mxu0
        %v785 = vadd.f32 0.0, %v784
        %v786 = vpop.f32.mrf.mxu0
        %v787 = vpop.f32.mrf.mxu0
        %v788 = vadd.f32 0.0, %v787
        %v789 = vpop.f32.mrf.mxu0
        %790 = vmatprep.mubr.bf16.mxu0 0
        %791 = vmatmul.mubr.bf16.gmra.mxu0 %v700
        %v792 = vpop.f32.mrf.mxu0
        %v793 = vadd.f32 0.0, %v792
        %v794 = vpop.f32.mrf.mxu0
        %v795 = vpop.f32.mrf.mxu0
        %v796 = vadd.f32 0.0, %v795
        %v797 = vpop.f32.mrf.mxu0
        %798 = vdwg.mxu0
        %v799 = vpack.c.bf16 %v740, %v737
        %v800 = vpack.c.bf16 %v748, %v745
        %v801 = vpack.c.bf16 %v756, %v753
        %v802 = vpack.c.bf16 %v764, %v761
        %v803 = vpack.c.bf16 %v772, %v769
        %v804 = vpack.c.bf16 %v780, %v777
        %v805 = vpack.c.bf16 %v788, %v785
        %v806 = vpack.c.bf16 %v796, %v793
        %v815 = vunpack.c.l.b16 %v799
        %v816 = vunpack.c.h.b16 %v799
        %v817 = vunpack.c.l.b16 %v800
        %v818 = vunpack.c.h.b16 %v800
        %v819 = vunpack.c.l.b16 %v801
        %v820 = vunpack.c.h.b16 %v801
        %v821 = vunpack.c.l.b16 %v802
        %v822 = vunpack.c.h.b16 %v802
        %v823 = vunpack.c.l.b16 %v803
        %v824 = vunpack.c.h.b16 %v803
        %v825 = vunpack.c.l.b16 %v804
        %v826 = vunpack.c.h.b16 %v804
        %v827 = vunpack.c.l.b16 %v805
        %v828 = vunpack.c.h.b16 %v805
        %v829 = vunpack.c.l.b16 %v806
        %v830 = vunpack.c.h.b16 %v806
        %v831 = vpack.c.b16 %v815, %v815
        %v832 = vpack.c.b16 %v816, %v816
        %v833 = vpack.c.b16 %v817, %v817
        %v834 = vpack.c.b16 %v818, %v818
        %v835 = vpack.c.b16 %v819, %v819
        %v836 = vpack.c.b16 %v820, %v820
        %v837 = vpack.c.b16 %v821, %v821
        %v838 = vpack.c.b16 %v822, %v822
        %v839 = vpack.c.b16 %v823, %v823
        %v840 = vpack.c.b16 %v824, %v824
        %v841 = vpack.c.b16 %v825, %v825
        %v842 = vpack.c.b16 %v826, %v826
        %v843 = vpack.c.b16 %v827, %v827
        %v844 = vpack.c.b16 %v828, %v828
        %v845 = vpack.c.b16 %v829, %v829
        %v846 = vpack.c.b16 %v830, %v830
        %863 = vst [vmem:[%s194] sm:$0xf] %v831
        %864 = vst [vmem:[%s194 + $0x4] sm:$0xf] %v832
        %865 = vst [vmem:[%s194 + $0x8] sm:$0xf] %v833
        %866 = vst [vmem:[%s194 + $0xc] sm:$0xf] %v834
        %867 = vst [vmem:[%s194 + $0x10] sm:$0xf] %v835
        %868 = vst [vmem:[%s194 + $0x14] sm:$0xf] %v836
        %869 = vst [vmem:[%s194 + $0x18] sm:$0xf] %v837
        %870 = vst [vmem:[%s194 + $0x1c] sm:$0xf] %v838
        %871 = vst [vmem:[%s194 + $0x20] sm:$0xf] %v839
        %872 = vst [vmem:[%s194 + $0x24] sm:$0xf] %v840
        %873 = vst [vmem:[%s194 + $0x28] sm:$0xf] %v841
        %874 = vst [vmem:[%s194 + $0x2c] sm:$0xf] %v842
        %875 = vst [vmem:[%s194 + $0x30] sm:$0xf] %v843
        %876 = vst [vmem:[%s194 + $0x34] sm:$0xf] %v844
        %877 = vst [vmem:[%s194 + $0x38] sm:$0xf] %v845
        %878 = vst [vmem:[%s194 + $0x3c] sm:$0xf] %v846
        %s879 = sand.u32 %s112, 1
        %s880 = scalar_lea.sflag [#allocation4], %s879
        %s881 = sand.u32 %s112, 1
        %s882 = smul.addr %s881, 64
        %s883 = scalar_lea.vmem [#allocation3], %s882
        // Predicated region
        $region37: #{tpu_custom_call.1} parent=31 // pred_check
          %p884 = pneg %p122
        $region38: #{tpu_custom_call.1} parent=31 // pred_check_branch
          %886 = sbr.rel (%p884) target = $region40
        $region39: #{tpu_custom_call.1} parent=31 // pred_region
          %s887 = smul.u32 16, %s22
          %s889 = ssub.s32 1024, 1024
          %890 = vsyncadd %s880, %s889
          %s891 = smul.addr %s887, 2
          %s892 = sadd.s32 %s21, %s891
          %s893 = smul.addr %s892, 64
          %s894 = scalar_lea.hbm %s3, %s893
          %s895 = sshll.u32 %s883, 4
          %s896 = int_to_ptr.vmem [resolvable:$true] %s895
          %901 = dma.vmem_to_hbm [thread:$0]  %s896, 1024, %s894, %s880, 64, 128, 4
        $region40: #{tpu_custom_call.1} parent=31 // pred_fallthru
          _
      $region32: #{tpu_custom_call.1} parent=5 // pred_fallthru
        _
      %p902 = scmp.le.s32.totalorder 2, %s12
      // Predicated region
      $region41: #{tpu_custom_call.1} parent=5 // pred_check
        %p903 = pneg %p902
      $region42: #{tpu_custom_call.1} parent=5 // pred_check_branch
        %905 = sbr.rel (%p903) target = $region44
      $region43: #{tpu_custom_call.1} parent=5 // pred_region
        %s906 = ssub.s32 %s12, 2
        // Predicated region
        $region45: #{tpu_custom_call.1} parent=43 // pred_check
          %p907 = pneg %p128
        $region46: #{tpu_custom_call.1} parent=43 // pred_check_branch
          %909 = sbr.rel (%p907) target = $region48
        $region47: #{tpu_custom_call.1} parent=43 // pred_region
          %s910 = sand.u32 %s113, 1
          %s911 = scalar_lea.sflag [#allocation4], %s910
          %s912 = sand.u32 %s113, 1
          %s913 = smul.addr %s912, 64
          %s914 = scalar_lea.vmem [#allocation3], %s913
          %915 = dma.done %s911, 1024
        $region48: #{tpu_custom_call.1} parent=43 // pred_fallthru
          _
      $region44: #{tpu_custom_call.1} parent=5 // pred_fallthru
        _
    $region6: #{tpu_custom_call.1} parent=1 // loop_footer
      %s16 = sadd.s32 1, %s12
    $region7: #{tpu_custom_call.1} parent=1 // loop_footer_branch
      %11 = sbr.rel target = $region3
    $region8: #{tpu_custom_call.1} parent=1 // loop_exit
      _
    %916 = vsyncpa [#allocation4], 1
    %s917 = scalar_lea.sflag [#allocation4], 1
    %918 = vsyncpa %s917, 1

</llo_original>
